<compile_context>
chip_gen: v7x
topology: tpu7x:2x2x1
jax: 0.10.0
libtpu: 0.0.40
codegen_flags: <defaults>
</compile_context>

<pallas_src>
import jax
import jax.numpy as jnp
from jax import lax
from jax.experimental import pallas as pl
from jax.experimental.pallas import tpu as pltpu


def discriminator_v2_kernel(x_ref, w1_ref, b1_ref, w2_ref, b2_ref,
                            w3_ref, b3_ref, out_ref):
    x = x_ref[...]                                            # (TB, D) bf16

    # Linear(D, 512) + LeakyReLU(0.2)  -- bf16 x bf16 -> f32 accumulate on MXU
    h1 = jnp.dot(x, w1_ref[...], preferred_element_type=jnp.float32)
    h1 = h1 + b1_ref[...]                                     # f32 bias
    h1 = jnp.maximum(h1, 0.2 * h1)                            # leaky_relu(0.2), f32

    # Linear(512, 256) + LeakyReLU(0.2)
    h2 = jnp.dot(h1.astype(jnp.bfloat16), w2_ref[...],
                 preferred_element_type=jnp.float32)
    h2 = h2 + b2_ref[...]
    h2 = jnp.maximum(h2, 0.2 * h2)

    # Linear(256, 1): w3 kept in torch-native (out=1, in=256) layout.
    # Contract the 256-dim of w3 against the 256-dim of h2 -> (1, TB), which
    # is already lane-dense for the (1, TB) output block (no transpose, no
    # masked lane-1 stores).
    out = lax.dot_general(
        w3_ref[...], h2.astype(jnp.bfloat16),
        dimension_numbers=(((1,), (1,)), ((), ())),
        preferred_element_type=jnp.float32)                   # (1, TB)
    out_ref[...] = (out + b3_ref[...]).astype(out_ref.dtype)


_BATCH_TILE = 256  # fills the 2x256^2 MXU on v6e/v7x; >=2 grid steps when bs > tile


def _batch_tiling(bs):
    """Return (padded_bs, tile).  Small batches -> one block; large batches ->
    256-row tiles with zero-padding up to the next tile multiple."""
    if bs <= _BATCH_TILE:
        return bs, bs
    padded = ((bs + _BATCH_TILE - 1) // _BATCH_TILE) * _BATCH_TILE
    return padded, _BATCH_TILE


def discriminator_v2(x, w1, b1, w2, b2, w3, b3):
    """DiscriminatorV2 forward.

    x:  [bs, ...]              (flattened to [bs, D], like torch x.view(bs, -1))
    w1: [D, 512],   b1: [1, 512]   (torch Linear weight pre-transposed to (in, out))
    w2: [512, 256], b2: [1, 256]
    w3: [1, 256],   b3: [1, 1]     (torch-native (out, in) layout for the 1-unit head)
    returns: [bs, 1] float32
    """
    bs = x.shape[0]
    xf = x.reshape(bs, -1)                     # wrapper-side layout plumbing
    d = xf.shape[1]
    h1 = w1.shape[1]
    h2 = w2.shape[1]

    padded_bs, tb = _batch_tiling(bs)
    if padded_bs != bs:
        xf = jnp.pad(xf, ((0, padded_bs - bs), (0, 0)))
    grid = (padded_bs // tb,)

    # bf16 MXU operands; f32 biases / activations / accumulation.
    xf = xf.astype(jnp.bfloat16)
    w1 = w1.astype(jnp.bfloat16)
    w2 = w2.astype(jnp.bfloat16)
    w3 = w3.astype(jnp.bfloat16)
    b1 = b1.astype(jnp.float32)
    b2 = b2.astype(jnp.float32)
    b3 = b3.astype(jnp.float32)

    out2d = pl.pallas_call(
        discriminator_v2_kernel,
        out_shape=jax.ShapeDtypeStruct((1, padded_bs), jnp.float32),
        grid_spec=pltpu.PrefetchScalarGridSpec(
            num_scalar_prefetch=0,
            grid=grid,
            in_specs=[
                pl.BlockSpec((tb, d), lambda i: (i, 0)),      # x (flattened, bf16)
                pl.BlockSpec((d, h1), lambda i: (0, 0)),      # w1 (resident)
                pl.BlockSpec((1, h1), lambda i: (0, 0)),      # b1
                pl.BlockSpec((h1, h2), lambda i: (0, 0)),     # w2 (resident)
                pl.BlockSpec((1, h2), lambda i: (0, 0)),      # b2
                pl.BlockSpec((1, h2), lambda i: (0, 0)),      # w3 (row vector)
                pl.BlockSpec((1, 1), lambda i: (0, 0)),       # b3
            ],
            out_specs=pl.BlockSpec((1, tb), lambda i: (0, i)),  # lane-dense output
        ),
        compiler_params=pltpu.CompilerParams(
            dimension_semantics=("parallel",)),
    )(xf, w1, b1, w2, b2, w3, b3)

    # (1, padded_bs) -> (bs, 1); pure vector reshape (no real transpose work).
    return out2d[0, :bs].reshape(bs, 1)


if __name__ == "__main__":
    # Graph-discriminator shapes: node embeddings [bs, n_node, hidden] flatten
    # to [bs, n_node * hidden] = [2, 512] before the MLP (512 % 128 == 0).
    bs, n_node, hidden = 2, 16, 32
    d = n_node * hidden

    key = jax.random.PRNGKey(0)
    kx, kw1, kb1, kw2, kb2, kw3, kb3 = jax.random.split(key, 7)

    x = jax.random.normal(kx, (bs, n_node, hidden), jnp.float32)

    w1 = jax.random.normal(kw1, (d, 512), jnp.float32) / jnp.sqrt(jnp.float32(d))
    b1 = jax.random.normal(kb1, (1, 512), jnp.float32) * 0.01
    w2 = jax.random.normal(kw2, (512, 256), jnp.float32) / jnp.sqrt(512.0)
    b2 = jax.random.normal(kb2, (1, 256), jnp.float32) * 0.01
    w3 = jax.random.normal(kw3, (1, 256), jnp.float32) / jnp.sqrt(256.0)
    b3 = jax.random.normal(kb3, (1, 1), jnp.float32) * 0.01

    out = discriminator_v2(x, w1, b1, w2, b2, w3, b3)
    jax.block_until_ready(out)

    # Pure-JAX f32 reference (same math as the PyTorch module).
    def leaky(v):
        return jnp.maximum(v, 0.2 * v)

    xf = x.reshape(bs, -1)
    ref = leaky(xf @ w1 + b1)
    ref = leaky(ref @ w2 + b2)
    ref = ref @ w3.T + b3

    assert out.shape == (bs, 1)
    assert bool(jnp.all(jnp.isfinite(out)))
    # bf16 MXU operands => ~1e-2-level relative error vs. the f32 reference.
    assert bool(jnp.allclose(out, ref, rtol=2e-2, atol=2e-2))

    print("KERNEL_OK")
</pallas_src>

<mosaic_0001>
module attributes {stable_mosaic.version = 11 : i64} {
  func.func @discriminator_v2_kernel(%arg0: i32, %arg1: memref<2x512xbf16, #tpu.memory_space<vmem>>, %arg2: memref<512x512xbf16, #tpu.memory_space<vmem>>, %arg3: memref<1x512xf32, #tpu.memory_space<vmem>>, %arg4: memref<512x256xbf16, #tpu.memory_space<vmem>>, %arg5: memref<1x256xf32, #tpu.memory_space<vmem>>, %arg6: memref<1x256xbf16, #tpu.memory_space<vmem>>, %arg7: memref<1x1xf32, #tpu.memory_space<vmem>>, %arg8: memref<1x2xf32, #tpu.memory_space<vmem>>) attributes {dimension_semantics = [#tpu.dimension_semantics<parallel>], iteration_bounds = array<i64: 1>, scalar_prefetch = 0 : i64, scratch_operands = 0 : i64, tpu.core_type = #tpu.core_type<tc>, window_params = [{transform_indices = @transform_0, window_bounds = array<i64: 2, 512>}, {pipeline_mode = #tpu.pipeline_mode<synchronous>, transform_indices = @transform_1, window_bounds = array<i64: 512, 512>}, {pipeline_mode = #tpu.pipeline_mode<synchronous>, transform_indices = @transform_2, window_bounds = array<i64: 1, 512>}, {pipeline_mode = #tpu.pipeline_mode<synchronous>, transform_indices = @transform_3, window_bounds = array<i64: 512, 256>}, {pipeline_mode = #tpu.pipeline_mode<synchronous>, transform_indices = @transform_4, window_bounds = array<i64: 1, 256>}, {pipeline_mode = #tpu.pipeline_mode<synchronous>, transform_indices = @transform_5, window_bounds = array<i64: 1, 256>}, {pipeline_mode = #tpu.pipeline_mode<synchronous>, transform_indices = @transform_6, window_bounds = array<i64: 1, 1>}, {transform_indices = @transform_7, window_bounds = array<i64: 1, 2>}]} {
    %c0 = arith.constant 0 : index
    %c0_0 = arith.constant 0 : index
    %0 = vector.load %arg1[%c0, %c0_0] : memref<2x512xbf16, #tpu.memory_space<vmem>>, vector<2x512xbf16>
    %c0_1 = arith.constant 0 : index
    %c0_2 = arith.constant 0 : index
    %1 = vector.load %arg2[%c0_1, %c0_2] : memref<512x512xbf16, #tpu.memory_space<vmem>>, vector<512x512xbf16>
    %cst = arith.constant dense<0.000000e+00> : vector<2x512xf32>
    %2 = tpu.matmul %0, %1, %cst {dimension_numbers = #tpu.dot_dimension_numbers<[1], [0], [0], [1], [0, 0, 1, 1], [], []>} : vector<2x512xbf16>, vector<512x512xbf16>, vector<2x512xf32> -> vector<2x512xf32>
    %c0_3 = arith.constant 0 : index
    %c0_4 = arith.constant 0 : index
    %3 = vector.load %arg3[%c0_3, %c0_4] : memref<1x512xf32, #tpu.memory_space<vmem>>, vector<1x512xf32>
    %4 = vector.broadcast %3 : vector<1x512xf32> to vector<2x512xf32>
    %5 = arith.addf %2, %4 : vector<2x512xf32>
    %cst_5 = arith.constant 2.000000e-01 : f32
    %6 = vector.broadcast %cst_5 : f32 to vector<2x512xf32>
    %7 = arith.mulf %6, %5 : vector<2x512xf32>
    %8 = arith.maximumf %5, %7 : vector<2x512xf32>
    %9 = arith.truncf %8 : vector<2x512xf32> to vector<2x512xbf16>
    %c0_6 = arith.constant 0 : index
    %c0_7 = arith.constant 0 : index
    %10 = vector.load %arg4[%c0_6, %c0_7] : memref<512x256xbf16, #tpu.memory_space<vmem>>, vector<512x256xbf16>
    %cst_8 = arith.constant dense<0.000000e+00> : vector<2x256xf32>
    %11 = tpu.matmul %9, %10, %cst_8 {dimension_numbers = #tpu.dot_dimension_numbers<[1], [0], [0], [1], [0, 0, 1, 1], [], []>} : vector<2x512xbf16>, vector<512x256xbf16>, vector<2x256xf32> -> vector<2x256xf32>
    %c0_9 = arith.constant 0 : index
    %c0_10 = arith.constant 0 : index
    %12 = vector.load %arg5[%c0_9, %c0_10] : memref<1x256xf32, #tpu.memory_space<vmem>>, vector<1x256xf32>
    %13 = vector.broadcast %12 : vector<1x256xf32> to vector<2x256xf32>
    %14 = arith.addf %11, %13 : vector<2x256xf32>
    %cst_11 = arith.constant 2.000000e-01 : f32
    %15 = vector.broadcast %cst_11 : f32 to vector<2x256xf32>
    %16 = arith.mulf %15, %14 : vector<2x256xf32>
    %17 = arith.maximumf %14, %16 : vector<2x256xf32>
    %c0_12 = arith.constant 0 : index
    %c0_13 = arith.constant 0 : index
    %18 = vector.load %arg6[%c0_12, %c0_13] : memref<1x256xbf16, #tpu.memory_space<vmem>>, vector<1x256xbf16>
    %19 = arith.truncf %17 : vector<2x256xf32> to vector<2x256xbf16>
    %cst_14 = arith.constant dense<0.000000e+00> : vector<1x2xf32>
    %20 = tpu.matmul %18, %19, %cst_14 {dimension_numbers = #tpu.dot_dimension_numbers<[1], [1], [0], [0], [0, 0, 1, 0], [], []>} : vector<1x256xbf16>, vector<2x256xbf16>, vector<1x2xf32> -> vector<1x2xf32>
    %c0_15 = arith.constant 0 : index
    %c0_16 = arith.constant 0 : index
    %21 = vector.load %arg7[%c0_15, %c0_16] : memref<1x1xf32, #tpu.memory_space<vmem>>, vector<1x1xf32>
    %22 = vector.broadcast %21 : vector<1x1xf32> to vector<1x2xf32>
    %23 = arith.addf %20, %22 : vector<1x2xf32>
    %c0_17 = arith.constant 0 : index
    %c0_18 = arith.constant 0 : index
    %24 = vector.load %arg8[%c0_17, %c0_18] : memref<1x2xf32, #tpu.memory_space<vmem>>, vector<1x2xf32>
    tpu.vector_store %arg8[%c0_17, %c0_18], %23 {strides = array<i32>} : memref<1x2xf32, #tpu.memory_space<vmem>>, vector<1x2xf32>,
    return
  }
  func.func @transform_0(%arg0: i32) -> (i32, i32) {
    %c0_i32 = arith.constant 0 : i32
    %c0_i32_0 = arith.constant 0 : i32
    return %arg0, %c0_i32 : i32, i32
  }
  func.func @transform_1(%arg0: i32) -> (i32, i32) {
    %c0_i32 = arith.constant 0 : i32
    %c0_i32_0 = arith.constant 0 : i32
    %c0_i32_1 = arith.constant 0 : i32
    return %c0_i32, %c0_i32_0 : i32, i32
  }
  func.func @transform_2(%arg0: i32) -> (i32, i32) {
    %c0_i32 = arith.constant 0 : i32
    %c0_i32_0 = arith.constant 0 : i32
    %c0_i32_1 = arith.constant 0 : i32
    return %c0_i32, %c0_i32_0 : i32, i32
  }
  func.func @transform_3(%arg0: i32) -> (i32, i32) {
    %c0_i32 = arith.constant 0 : i32
    %c0_i32_0 = arith.constant 0 : i32
    %c0_i32_1 = arith.constant 0 : i32
    return %c0_i32, %c0_i32_0 : i32, i32
  }
  func.func @transform_4(%arg0: i32) -> (i32, i32) {
    %c0_i32 = arith.constant 0 : i32
    %c0_i32_0 = arith.constant 0 : i32
    %c0_i32_1 = arith.constant 0 : i32
    return %c0_i32, %c0_i32_0 : i32, i32
  }
  func.func @transform_5(%arg0: i32) -> (i32, i32) {
    %c0_i32 = arith.constant 0 : i32
    %c0_i32_0 = arith.constant 0 : i32
    %c0_i32_1 = arith.constant 0 : i32
    return %c0_i32, %c0_i32_0 : i32, i32
  }
  func.func @transform_6(%arg0: i32) -> (i32, i32) {
    %c0_i32 = arith.constant 0 : i32
    %c0_i32_0 = arith.constant 0 : i32
    %c0_i32_1 = arith.constant 0 : i32
    return %c0_i32, %c0_i32_0 : i32, i32
  }
  func.func @transform_7(%arg0: i32) -> (i32, i32) {
    %c0_i32 = arith.constant 0 : i32
    %c0_i32_0 = arith.constant 0 : i32
    return %c0_i32, %arg0 : i32, i32
  }
}

</mosaic_0001>

<llo_original>
// kernel: tpu_custom_call.1
$region0: #{tpu_custom_call.1}
  #allocation0 [shape = 'u32[]', space=smem, size = 0x4, offset = 0x4, fixed_abs, tag = 'smem constant byte address 0x4 - core index']
  #allocation1 [shape = 'u32[144,128]{1,0:T(1,128)}', space=vmem, size = 0x12000, scoped, tag = 'internal scratch']
  #allocation2 [shape = 'f32[1,1]{1,0:T(1,128)S(1)}', space=vmem, size = 0x200, scoped, tag = 'scoped memory for tpu_custom_call.1']
  %s0 = inlined_call_operand.hbm [shape: bf16[2,512], index: 0, kind: input, shape index: {}]
  %s1 = inlined_call_operand.hbm [shape: bf16[512,512], index: 1, kind: input, shape index: {}]
  %s2 = inlined_call_operand.vmem [shape: f32[1,512], index: 2, kind: input, shape index: {}]
  %s3 = inlined_call_operand.hbm [shape: bf16[512,256], index: 3, kind: input, shape index: {}]
  %s4 = inlined_call_operand.vmem [shape: f32[1,256], index: 4, kind: input, shape index: {}]
  %s5 = inlined_call_operand.vmem [shape: bf16[1,256], index: 5, kind: input, shape index: {}]
  %s6 = inlined_call_operand.<no memory space> [shape: f32[1,1], index: 6, kind: input, shape index: {}]
  %s7 = inlined_call_operand.hbm [shape: f32[1,2], index: 7, kind: output, shape index: {}]
  %s8 = sld [smem:[#allocation0]]
  $region50: #{tpu_custom_call.1} parent=0
    _
  %s10 = ssub.s32 1, %s8
  %s11 = scalar_select 0, %s10, %s8
  %v12 = vstv %s6
  %13 = vst [vmem:[#allocation2] sm:$0x1] %v12
  $region1: #{tpu_custom_call.1} parent=0
    #allocation3 [shape = 'u8[2048]{0}', space=vmem, size = 0x800, scoped, tag = 'input window, operand 0, single buffered']
    #allocation4 [shape = 's32[1]{0}', space=sflag, size = 0x4, scoped, tag = 'scoped memory for tpu_custom_call.1']
    #allocation5 [shape = 's32[1]{0}', space=sflag, size = 0x4, scoped, tag = 'scoped memory for tpu_custom_call.1']
    #allocation6 [shape = 'u8[524288]{0}', space=vmem, size = 0x80000, scoped, tag = 'input window, operand 1, single buffered']
    #allocation7 [shape = 's32[1]{0}', space=sflag, size = 0x4, scoped, tag = 'scoped memory for tpu_custom_call.1']
    #allocation8 [shape = 'u8[262144]{0}', space=vmem, size = 0x40000, scoped, tag = 'input window, operand 3, single buffered']
    #allocation9 [shape = 'u8[512]{0}', space=vmem, size = 0x400, scoped, tag = 'output window, operand 0, single buffered']
    %14 = vsyncpa [#allocation4], 0
    %15 = vsyncpa [#allocation7], 0
    %16 = vsyncpa [#allocation5], 0
    // Predicated region
    $region2: #{tpu_custom_call.1} parent=1 // pred_check
      _
    $region3: #{tpu_custom_call.1} parent=1 // pred_check_branch
      %18 = sbr.rel (0) target = $region5
    $region4: #{tpu_custom_call.1} parent=1 // pred_region
      %s20 = ssub.s32 64, 64
      %21 = vsyncadd [#allocation4], %s20
      %s23 = sshll.u32 [#allocation3], 4
      %s24 = int_to_ptr.vmem [resolvable:$true] %s23
      %26 = dma.hbm_to_vmem [thread:$0]  %s0, 64, %s24, [#allocation4]
    $region5: #{tpu_custom_call.1} parent=1 // pred_fallthru
      _
    // Predicated region
    $region6: #{tpu_custom_call.1} parent=1 // pred_check
      _
    $region7: #{tpu_custom_call.1} parent=1 // pred_check_branch
      %28 = sbr.rel (0) target = $region9
    $region8: #{tpu_custom_call.1} parent=1 // pred_region
      %s30 = ssub.s32 16384, 16384
      %31 = vsyncadd [#allocation7], %s30
      %s32 = sshll.u32 [#allocation6], 4
      %s33 = int_to_ptr.vmem [resolvable:$true] %s32
      %38 = dma.hbm_to_vmem [thread:$0]  %s1, 16384, %s33, [#allocation7], 256, 256, 16
    $region9: #{tpu_custom_call.1} parent=1 // pred_fallthru
      _
    // Predicated region
    $region10: #{tpu_custom_call.1} parent=1 // pred_check
      _
    $region11: #{tpu_custom_call.1} parent=1 // pred_check_branch
      %40 = sbr.rel (0) target = $region13
    $region12: #{tpu_custom_call.1} parent=1 // pred_region
      _
    $region13: #{tpu_custom_call.1} parent=1 // pred_fallthru
      _
    // Predicated region
    $region14: #{tpu_custom_call.1} parent=1 // pred_check
      _
    $region15: #{tpu_custom_call.1} parent=1 // pred_check_branch
      %42 = sbr.rel (0) target = $region17
    $region16: #{tpu_custom_call.1} parent=1 // pred_region
      %s44 = ssub.s32 8192, 8192
      %45 = vsyncadd [#allocation7], %s44
      %s46 = sshll.u32 [#allocation8], 4
      %s47 = int_to_ptr.vmem [resolvable:$true] %s46
      %52 = dma.hbm_to_vmem [thread:$0]  %s3, 8192, %s47, [#allocation7], 128, 128, 8
    $region17: #{tpu_custom_call.1} parent=1 // pred_fallthru
      _
    // Predicated region
    $region18: #{tpu_custom_call.1} parent=1 // pred_check
      _
    $region19: #{tpu_custom_call.1} parent=1 // pred_check_branch
      %54 = sbr.rel (0) target = $region21
    $region20: #{tpu_custom_call.1} parent=1 // pred_region
      _
    $region21: #{tpu_custom_call.1} parent=1 // pred_fallthru
      _
    // Predicated region
    $region22: #{tpu_custom_call.1} parent=1 // pred_check
      _
    $region23: #{tpu_custom_call.1} parent=1 // pred_check_branch
      %56 = sbr.rel (0) target = $region25
    $region24: #{tpu_custom_call.1} parent=1 // pred_region
      _
    $region25: #{tpu_custom_call.1} parent=1 // pred_fallthru
      _
    // Predicated region
    $region26: #{tpu_custom_call.1} parent=1 // pred_check
      _
    $region27: #{tpu_custom_call.1} parent=1 // pred_check_branch
      %58 = sbr.rel (0) target = $region29
    $region28: #{tpu_custom_call.1} parent=1 // pred_region
      _
    $region29: #{tpu_custom_call.1} parent=1 // pred_fallthru
      _
    // Predicated region
    $region30: #{tpu_custom_call.1} parent=1 // pred_check
      _
    $region31: #{tpu_custom_call.1} parent=1 // pred_check_branch
      %60 = sbr.rel (0) target = $region33
    $region32: #{tpu_custom_call.1} parent=1 // pred_region
      %61 = dma.done [#allocation4], 64
    $region33: #{tpu_custom_call.1} parent=1 // pred_fallthru
      _
    // Predicated region
    $region34: #{tpu_custom_call.1} parent=1 // pred_check
      _
    $region35: #{tpu_custom_call.1} parent=1 // pred_check_branch
      %63 = sbr.rel (0) target = $region37
    $region36: #{tpu_custom_call.1} parent=1 // pred_region
      %64 = dma.done [#allocation7], 16384
    $region37: #{tpu_custom_call.1} parent=1 // pred_fallthru
      _
    // Predicated region
    $region38: #{tpu_custom_call.1} parent=1 // pred_check
      _
    $region39: #{tpu_custom_call.1} parent=1 // pred_check_branch
      %66 = sbr.rel (0) target = $region41
    $region40: #{tpu_custom_call.1} parent=1 // pred_region
      %67 = dma.done [#allocation7], 8192
    $region41: #{tpu_custom_call.1} parent=1 // pred_fallthru
      _
    %v69 = vld [vmem:[#allocation3] sm:$0xf]
    %v70 = vld [vmem:[#allocation6] sm:$0xff]
    %v71 = vld [vmem:[#allocation6 + $0x8] sm:$0xff]
    %v72 = vld [vmem:[#allocation6 + $0x10] sm:$0xff]
    %v73 = vld [vmem:[#allocation6 + $0x18] sm:$0xff]
    %v74 = vld [vmem:[#allocation6 + $0x20] sm:$0xff]
    %v75 = vld [vmem:[#allocation6 + $0x28] sm:$0xff]
    %v76 = vld [vmem:[#allocation6 + $0x30] sm:$0xff]
    %v77 = vld [vmem:[#allocation6 + $0x38] sm:$0xff]
    %v78 = vld [vmem:[#allocation6 + $0x40] sm:$0xff]
    %v79 = vld [vmem:[#allocation6 + $0x48] sm:$0xff]
    %v80 = vld [vmem:[#allocation6 + $0x50] sm:$0xff]
    %v81 = vld [vmem:[#allocation6 + $0x58] sm:$0xff]
    %v82 = vld [vmem:[#allocation6 + $0x60] sm:$0xff]
    %v83 = vld [vmem:[#allocation6 + $0x68] sm:$0xff]
    %v84 = vld [vmem:[#allocation6 + $0x70] sm:$0xff]
    %v85 = vld [vmem:[#allocation6 + $0x78] sm:$0xff]
    %v86 = vld [vmem:[#allocation6 + $0x80] sm:$0xff]
    %v87 = vld [vmem:[#allocation6 + $0x88] sm:$0xff]
    %v88 = vld [vmem:[#allocation6 + $0x90] sm:$0xff]
    %v89 = vld [vmem:[#allocation6 + $0x98] sm:$0xff]
    %v90 = vld [vmem:[#allocation6 + $0xa0] sm:$0xff]
    %v91 = vld [vmem:[#allocation6 + $0xa8] sm:$0xff]
    %v92 = vld [vmem:[#allocation6 + $0xb0] sm:$0xff]
    %v93 = vld [vmem:[#allocation6 + $0xb8] sm:$0xff]
    %v94 = vld [vmem:[#allocation6 + $0xc0] sm:$0xff]
    %v95 = vld [vmem:[#allocation6 + $0xc8] sm:$0xff]
    %v96 = vld [vmem:[#allocation6 + $0xd0] sm:$0xff]
    %v97 = vld [vmem:[#allocation6 + $0xd8] sm:$0xff]
    %v98 = vld [vmem:[#allocation6 + $0xe0] sm:$0xff]
    %v99 = vld [vmem:[#allocation6 + $0xe8] sm:$0xff]
    %v100 = vld [vmem:[#allocation6 + $0xf0] sm:$0xff]
    %v101 = vld [vmem:[#allocation6 + $0xf8] sm:$0xff]
    %v102 = vld [vmem:[#allocation6 + $0x100] sm:$0xff]
    %v103 = vld [vmem:[#allocation6 + $0x108] sm:$0xff]
    %v104 = vld [vmem:[#allocation6 + $0x110] sm:$0xff]
    %v105 = vld [vmem:[#allocation6 + $0x118] sm:$0xff]
    %v106 = vld [vmem:[#allocation6 + $0x120] sm:$0xff]
    %v107 = vld [vmem:[#allocation6 + $0x128] sm:$0xff]
    %v108 = vld [vmem:[#allocation6 + $0x130] sm:$0xff]
    %v109 = vld [vmem:[#allocation6 + $0x138] sm:$0xff]
    %v110 = vld [vmem:[#allocation6 + $0x140] sm:$0xff]
    %v111 = vld [vmem:[#allocation6 + $0x148] sm:$0xff]
    %v112 = vld [vmem:[#allocation6 + $0x150] sm:$0xff]
    %v113 = vld [vmem:[#allocation6 + $0x158] sm:$0xff]
    %v114 = vld [vmem:[#allocation6 + $0x160] sm:$0xff]
    %v115 = vld [vmem:[#allocation6 + $0x168] sm:$0xff]
    %v116 = vld [vmem:[#allocation6 + $0x170] sm:$0xff]
    %v117 = vld [vmem:[#allocation6 + $0x178] sm:$0xff]
    %v118 = vld [vmem:[#allocation6 + $0x180] sm:$0xff]
    %v119 = vld [vmem:[#allocation6 + $0x188] sm:$0xff]
    %v120 = vld [vmem:[#allocation6 + $0x190] sm:$0xff]
    %v121 = vld [vmem:[#allocation6 + $0x198] sm:$0xff]
    %v122 = vld [vmem:[#allocation6 + $0x1a0] sm:$0xff]
    %v123 = vld [vmem:[#allocation6 + $0x1a8] sm:$0xff]
    %v124 = vld [vmem:[#allocation6 + $0x1b0] sm:$0xff]
    %v125 = vld [vmem:[#allocation6 + $0x1b8] sm:$0xff]
    %v126 = vld [vmem:[#allocation6 + $0x1c0] sm:$0xff]
    %v127 = vld [vmem:[#allocation6 + $0x1c8] sm:$0xff]
    %v128 = vld [vmem:[#allocation6 + $0x1d0] sm:$0xff]
    %v129 = vld [vmem:[#allocation6 + $0x1d8] sm:$0xff]
    %v130 = vld [vmem:[#allocation6 + $0x1e0] sm:$0xff]
    %v131 = vld [vmem:[#allocation6 + $0x1e8] sm:$0xff]
    %v132 = vld [vmem:[#allocation6 + $0x1f0] sm:$0xff]
    %v133 = vld [vmem:[#allocation6 + $0x1f8] sm:$0xff]
    %v134 = vld [vmem:[#allocation6 + $0x200] sm:$0xff]
    %v135 = vld [vmem:[#allocation6 + $0x208] sm:$0xff]
    %v136 = vld [vmem:[#allocation6 + $0x210] sm:$0xff]
    %v137 = vld [vmem:[#allocation6 + $0x218] sm:$0xff]
    %v138 = vld [vmem:[#allocation6 + $0x220] sm:$0xff]
    %v139 = vld [vmem:[#allocation6 + $0x228] sm:$0xff]
    %v140 = vld [vmem:[#allocation6 + $0x230] sm:$0xff]
    %v141 = vld [vmem:[#allocation6 + $0x238] sm:$0xff]
    %v142 = vld [vmem:[#allocation6 + $0x240] sm:$0xff]
    %v143 = vld [vmem:[#allocation6 + $0x248] sm:$0xff]
    %v144 = vld [vmem:[#allocation6 + $0x250] sm:$0xff]
    %v145 = vld [vmem:[#allocation6 + $0x258] sm:$0xff]
    %v146 = vld [vmem:[#allocation6 + $0x260] sm:$0xff]
    %v147 = vld [vmem:[#allocation6 + $0x268] sm:$0xff]
    %v148 = vld [vmem:[#allocation6 + $0x270] sm:$0xff]
    %v149 = vld [vmem:[#allocation6 + $0x278] sm:$0xff]
    %v150 = vld [vmem:[#allocation6 + $0x280] sm:$0xff]
    %v151 = vld [vmem:[#allocation6 + $0x288] sm:$0xff]
    %v152 = vld [vmem:[#allocation6 + $0x290] sm:$0xff]
    %v153 = vld [vmem:[#allocation6 + $0x298] sm:$0xff]
    %v154 = vld [vmem:[#allocation6 + $0x2a0] sm:$0xff]
    %v155 = vld [vmem:[#allocation6 + $0x2a8] sm:$0xff]
    %v156 = vld [vmem:[#allocation6 + $0x2b0] sm:$0xff]
    %v157 = vld [vmem:[#allocation6 + $0x2b8] sm:$0xff]
    %v158 = vld [vmem:[#allocation6 + $0x2c0] sm:$0xff]
    %v159 = vld [vmem:[#allocation6 + $0x2c8] sm:$0xff]
    %v160 = vld [vmem:[#allocation6 + $0x2d0] sm:$0xff]
    %v161 = vld [vmem:[#allocation6 + $0x2d8] sm:$0xff]
    %v162 = vld [vmem:[#allocation6 + $0x2e0] sm:$0xff]
    %v163 = vld [vmem:[#allocation6 + $0x2e8] sm:$0xff]
    %v164 = vld [vmem:[#allocation6 + $0x2f0] sm:$0xff]
    %v165 = vld [vmem:[#allocation6 + $0x2f8] sm:$0xff]
    %v166 = vld [vmem:[#allocation6 + $0x300] sm:$0xff]
    %v167 = vld [vmem:[#allocation6 + $0x308] sm:$0xff]
    %v168 = vld [vmem:[#allocation6 + $0x310] sm:$0xff]
    %v169 = vld [vmem:[#allocation6 + $0x318] sm:$0xff]
    %v170 = vld [vmem:[#allocation6 + $0x320] sm:$0xff]
    %v171 = vld [vmem:[#allocation6 + $0x328] sm:$0xff]
    %v172 = vld [vmem:[#allocation6 + $0x330] sm:$0xff]
    %v173 = vld [vmem:[#allocation6 + $0x338] sm:$0xff]
    %v174 = vld [vmem:[#allocation6 + $0x340] sm:$0xff]
    %v175 = vld [vmem:[#allocation6 + $0x348] sm:$0xff]
    %v176 = vld [vmem:[#allocation6 + $0x350] sm:$0xff]
    %v177 = vld [vmem:[#allocation6 + $0x358] sm:$0xff]
    %v178 = vld [vmem:[#allocation6 + $0x360] sm:$0xff]
    %v179 = vld [vmem:[#allocation6 + $0x368] sm:$0xff]
    %v180 = vld [vmem:[#allocation6 + $0x370] sm:$0xff]
    %v181 = vld [vmem:[#allocation6 + $0x378] sm:$0xff]
    %v182 = vld [vmem:[#allocation6 + $0x380] sm:$0xff]
    %v183 = vld [vmem:[#allocation6 + $0x388] sm:$0xff]
    %v184 = vld [vmem:[#allocation6 + $0x390] sm:$0xff]
    %v185 = vld [vmem:[#allocation6 + $0x398] sm:$0xff]
    %v186 = vld [vmem:[#allocation6 + $0x3a0] sm:$0xff]
    %v187 = vld [vmem:[#allocation6 + $0x3a8] sm:$0xff]
    %v188 = vld [vmem:[#allocation6 + $0x3b0] sm:$0xff]
    %v189 = vld [vmem:[#allocation6 + $0x3b8] sm:$0xff]
    %v190 = vld [vmem:[#allocation6 + $0x3c0] sm:$0xff]
    %v191 = vld [vmem:[#allocation6 + $0x3c8] sm:$0xff]
    %v192 = vld [vmem:[#allocation6 + $0x3d0] sm:$0xff]
    %v193 = vld [vmem:[#allocation6 + $0x3d8] sm:$0xff]
    %v194 = vld [vmem:[#allocation6 + $0x3e0] sm:$0xff]
    %v195 = vld [vmem:[#allocation6 + $0x3e8] sm:$0xff]
    %v196 = vld [vmem:[#allocation6 + $0x3f0] sm:$0xff]
    %v197 = vld [vmem:[#allocation6 + $0x3f8] sm:$0xff]
    %v198 = vld [vmem:[%s2] sm:$0xf]
    %v200 = vlaneseq
    %v201 = vshrl.u32 %v200, 7
    %v202 = vsub.s32 0, %v201
    %v203 = vrot.slane %v198, %v202
    %v204 = vlaneseq
    %v205 = vshrl.u32 %v204, 7
    %v206 = vsub.s32 1, %v205
    %v207 = vrot.slane %v198, %v206
    %v208 = vlaneseq
    %v209 = vshrl.u32 %v208, 7
    %v210 = vsub.s32 2, %v209
    %v211 = vrot.slane %v198, %v210
    %v212 = vlaneseq
    %v213 = vshrl.u32 %v212, 7
    %v214 = vsub.s32 3, %v213
    %v215 = vrot.slane %v198, %v214
    %v222 = vunpack.c.l.s4 1966171168
    %v223 = vunpack.c.0.s8 %v222
    %v224 = vlaneseq
    %v225 = vshrl.u32 %v224, 7
    %v226 = vsub.s32 %v223, %v225
    %v227 = vrot.slane %v69, %v226
    %v228 = vcombine.high %v227, %v227
    %v230 = vunpack.c.l.s4 1966171168
    %v231 = vunpack.c.0.s8 %v230
    %v232 = vlaneseq
    %v233 = vshrl.u32 %v232, 7
    %v234 = vsub.s32 %v231, %v233
    %v235 = vrot.slane %v227, %v234
    %v237 = vunpack.c.l.s4 1966171168
    %v238 = vunpack.c.0.s8 %v237
    %v239 = vlaneseq
    %v240 = vshrl.u32 %v239, 7
    %v241 = vsub.s32 %v238, %v240
    %v242 = vrot.slane %v228, %v241
    %v243 = vcombine.high %v235, %v235
    %v244 = vcombine.high %v242, %v242
    %v377 = vunpack.c.l.b16 %v70
    %v378 = vunpack.c.h.b16 %v70
    %v379 = vunpack.c.l.b16 %v71
    %v380 = vunpack.c.h.b16 %v71
    %v381 = vunpack.c.l.b16 %v72
    %v382 = vunpack.c.h.b16 %v72
    %v383 = vunpack.c.l.b16 %v73
    %v384 = vunpack.c.h.b16 %v73
    %v385 = vunpack.c.l.b16 %v74
    %v386 = vunpack.c.h.b16 %v74
    %v387 = vunpack.c.l.b16 %v75
    %v388 = vunpack.c.h.b16 %v75
    %v389 = vunpack.c.l.b16 %v76
    %v390 = vunpack.c.h.b16 %v76
    %v391 = vunpack.c.l.b16 %v77
    %v392 = vunpack.c.h.b16 %v77
    %v393 = vunpack.c.l.b16 %v78
    %v394 = vunpack.c.h.b16 %v78
    %v395 = vunpack.c.l.b16 %v79
    %v396 = vunpack.c.h.b16 %v79
    %v397 = vunpack.c.l.b16 %v80
    %v398 = vunpack.c.h.b16 %v80
    %v399 = vunpack.c.l.b16 %v81
    %v400 = vunpack.c.h.b16 %v81
    %v401 = vunpack.c.l.b16 %v82
    %v402 = vunpack.c.h.b16 %v82
    %v403 = vunpack.c.l.b16 %v83
    %v404 = vunpack.c.h.b16 %v83
    %v405 = vunpack.c.l.b16 %v84
    %v406 = vunpack.c.h.b16 %v84
    %v407 = vunpack.c.l.b16 %v85
    %v408 = vunpack.c.h.b16 %v85
    %v409 = vunpack.c.l.b16 %v86
    %v410 = vunpack.c.h.b16 %v86
    %v411 = vunpack.c.l.b16 %v87
    %v412 = vunpack.c.h.b16 %v87
    %v413 = vunpack.c.l.b16 %v88
    %v414 = vunpack.c.h.b16 %v88
    %v415 = vunpack.c.l.b16 %v89
    %v416 = vunpack.c.h.b16 %v89
    %v417 = vunpack.c.l.b16 %v90
    %v418 = vunpack.c.h.b16 %v90
    %v419 = vunpack.c.l.b16 %v91
    %v420 = vunpack.c.h.b16 %v91
    %v421 = vunpack.c.l.b16 %v92
    %v422 = vunpack.c.h.b16 %v92
    %v423 = vunpack.c.l.b16 %v93
    %v424 = vunpack.c.h.b16 %v93
    %v425 = vunpack.c.l.b16 %v94
    %v426 = vunpack.c.h.b16 %v94
    %v427 = vunpack.c.l.b16 %v95
    %v428 = vunpack.c.h.b16 %v95
    %v429 = vunpack.c.l.b16 %v96
    %v430 = vunpack.c.h.b16 %v96
    %v431 = vunpack.c.l.b16 %v97
    %v432 = vunpack.c.h.b16 %v97
    %v433 = vunpack.c.l.b16 %v98
    %v434 = vunpack.c.h.b16 %v98
    %v435 = vunpack.c.l.b16 %v99
    %v436 = vunpack.c.h.b16 %v99
    %v437 = vunpack.c.l.b16 %v100
    %v438 = vunpack.c.h.b16 %v100
    %v439 = vunpack.c.l.b16 %v101
    %v440 = vunpack.c.h.b16 %v101
    %v441 = vunpack.c.l.b16 %v102
    %v442 = vunpack.c.h.b16 %v102
    %v443 = vunpack.c.l.b16 %v103
    %v444 = vunpack.c.h.b16 %v103
    %v445 = vunpack.c.l.b16 %v104
    %v446 = vunpack.c.h.b16 %v104
    %v447 = vunpack.c.l.b16 %v105
    %v448 = vunpack.c.h.b16 %v105
    %v449 = vunpack.c.l.b16 %v106
    %v450 = vunpack.c.h.b16 %v106
    %v451 = vunpack.c.l.b16 %v107
    %v452 = vunpack.c.h.b16 %v107
    %v453 = vunpack.c.l.b16 %v108
    %v454 = vunpack.c.h.b16 %v108
    %v455 = vunpack.c.l.b16 %v109
    %v456 = vunpack.c.h.b16 %v109
    %v457 = vunpack.c.l.b16 %v110
    %v458 = vunpack.c.h.b16 %v110
    %v459 = vunpack.c.l.b16 %v111
    %v460 = vunpack.c.h.b16 %v111
    %v461 = vunpack.c.l.b16 %v112
    %v462 = vunpack.c.h.b16 %v112
    %v463 = vunpack.c.l.b16 %v113
    %v464 = vunpack.c.h.b16 %v113
    %v465 = vunpack.c.l.b16 %v114
    %v466 = vunpack.c.h.b16 %v114
    %v467 = vunpack.c.l.b16 %v115
    %v468 = vunpack.c.h.b16 %v115
    %v469 = vunpack.c.l.b16 %v116
    %v470 = vunpack.c.h.b16 %v116
    %v471 = vunpack.c.l.b16 %v117
    %v472 = vunpack.c.h.b16 %v117
    %v473 = vunpack.c.l.b16 %v118
    %v474 = vunpack.c.h.b16 %v118
    %v475 = vunpack.c.l.b16 %v119
    %v476 = vunpack.c.h.b16 %v119
    %v477 = vunpack.c.l.b16 %v120
    %v478 = vunpack.c.h.b16 %v120
    %v479 = vunpack.c.l.b16 %v121
    %v480 = vunpack.c.h.b16 %v121
    %v481 = vunpack.c.l.b16 %v122
    %v482 = vunpack.c.h.b16 %v122
    %v483 = vunpack.c.l.b16 %v123
    %v484 = vunpack.c.h.b16 %v123
    %v485 = vunpack.c.l.b16 %v124
    %v486 = vunpack.c.h.b16 %v124
    %v487 = vunpack.c.l.b16 %v125
    %v488 = vunpack.c.h.b16 %v125
    %v489 = vunpack.c.l.b16 %v126
    %v490 = vunpack.c.h.b16 %v126
    %v491 = vunpack.c.l.b16 %v127
    %v492 = vunpack.c.h.b16 %v127
    %v493 = vunpack.c.l.b16 %v128
    %v494 = vunpack.c.h.b16 %v128
    %v495 = vunpack.c.l.b16 %v129
    %v496 = vunpack.c.h.b16 %v129
    %v497 = vunpack.c.l.b16 %v130
    %v498 = vunpack.c.h.b16 %v130
    %v499 = vunpack.c.l.b16 %v131
    %v500 = vunpack.c.h.b16 %v131
    %v501 = vunpack.c.l.b16 %v132
    %v502 = vunpack.c.h.b16 %v132
    %v503 = vunpack.c.l.b16 %v133
    %v504 = vunpack.c.h.b16 %v133
    %v505 = vunpack.c.l.b16 %v134
    %v506 = vunpack.c.h.b16 %v134
    %v507 = vunpack.c.l.b16 %v135
    %v508 = vunpack.c.h.b16 %v135
    %v509 = vunpack.c.l.b16 %v136
    %v510 = vunpack.c.h.b16 %v136
    %v511 = vunpack.c.l.b16 %v137
    %v512 = vunpack.c.h.b16 %v137
    %v513 = vunpack.c.l.b16 %v138
    %v514 = vunpack.c.h.b16 %v138
    %v515 = vunpack.c.l.b16 %v139
    %v516 = vunpack.c.h.b16 %v139
    %v517 = vunpack.c.l.b16 %v140
    %v518 = vunpack.c.h.b16 %v140
    %v519 = vunpack.c.l.b16 %v141
    %v520 = vunpack.c.h.b16 %v141
    %v521 = vunpack.c.l.b16 %v142
    %v522 = vunpack.c.h.b16 %v142
    %v523 = vunpack.c.l.b16 %v143
    %v524 = vunpack.c.h.b16 %v143
    %v525 = vunpack.c.l.b16 %v144
    %v526 = vunpack.c.h.b16 %v144
    %v527 = vunpack.c.l.b16 %v145
    %v528 = vunpack.c.h.b16 %v145
    %v529 = vunpack.c.l.b16 %v146
    %v530 = vunpack.c.h.b16 %v146
    %v531 = vunpack.c.l.b16 %v147
    %v532 = vunpack.c.h.b16 %v147
    %v533 = vunpack.c.l.b16 %v148
    %v534 = vunpack.c.h.b16 %v148
    %v535 = vunpack.c.l.b16 %v149
    %v536 = vunpack.c.h.b16 %v149
    %v537 = vunpack.c.l.b16 %v150
    %v538 = vunpack.c.h.b16 %v150
    %v539 = vunpack.c.l.b16 %v151
    %v540 = vunpack.c.h.b16 %v151
    %v541 = vunpack.c.l.b16 %v152
    %v542 = vunpack.c.h.b16 %v152
    %v543 = vunpack.c.l.b16 %v153
    %v544 = vunpack.c.h.b16 %v153
    %v545 = vunpack.c.l.b16 %v154
    %v546 = vunpack.c.h.b16 %v154
    %v547 = vunpack.c.l.b16 %v155
    %v548 = vunpack.c.h.b16 %v155
    %v549 = vunpack.c.l.b16 %v156
    %v550 = vunpack.c.h.b16 %v156
    %v551 = vunpack.c.l.b16 %v157
    %v552 = vunpack.c.h.b16 %v157
    %v553 = vunpack.c.l.b16 %v158
    %v554 = vunpack.c.h.b16 %v158
    %v555 = vunpack.c.l.b16 %v159
    %v556 = vunpack.c.h.b16 %v159
    %v557 = vunpack.c.l.b16 %v160
    %v558 = vunpack.c.h.b16 %v160
    %v559 = vunpack.c.l.b16 %v161
    %v560 = vunpack.c.h.b16 %v161
    %v561 = vunpack.c.l.b16 %v162
    %v562 = vunpack.c.h.b16 %v162
    %v563 = vunpack.c.l.b16 %v163
    %v564 = vunpack.c.h.b16 %v163
    %v565 = vunpack.c.l.b16 %v164
    %v566 = vunpack.c.h.b16 %v164
    %v567 = vunpack.c.l.b16 %v165
    %v568 = vunpack.c.h.b16 %v165
    %v569 = vunpack.c.l.b16 %v166
    %v570 = vunpack.c.h.b16 %v166
    %v571 = vunpack.c.l.b16 %v167
    %v572 = vunpack.c.h.b16 %v167
    %v573 = vunpack.c.l.b16 %v168
    %v574 = vunpack.c.h.b16 %v168
    %v575 = vunpack.c.l.b16 %v169
    %v576 = vunpack.c.h.b16 %v169
    %v577 = vunpack.c.l.b16 %v170
    %v578 = vunpack.c.h.b16 %v170
    %v579 = vunpack.c.l.b16 %v171
    %v580 = vunpack.c.h.b16 %v171
    %v581 = vunpack.c.l.b16 %v172
    %v582 = vunpack.c.h.b16 %v172
    %v583 = vunpack.c.l.b16 %v173
    %v584 = vunpack.c.h.b16 %v173
    %v585 = vunpack.c.l.b16 %v174
    %v586 = vunpack.c.h.b16 %v174
    %v587 = vunpack.c.l.b16 %v175
    %v588 = vunpack.c.h.b16 %v175
    %v589 = vunpack.c.l.b16 %v176
    %v590 = vunpack.c.h.b16 %v176
    %v591 = vunpack.c.l.b16 %v177
    %v592 = vunpack.c.h.b16 %v177
    %v593 = vunpack.c.l.b16 %v178
    %v594 = vunpack.c.h.b16 %v178
    %v595 = vunpack.c.l.b16 %v179
    %v596 = vunpack.c.h.b16 %v179
    %v597 = vunpack.c.l.b16 %v180
    %v598 = vunpack.c.h.b16 %v180
    %v599 = vunpack.c.l.b16 %v181
    %v600 = vunpack.c.h.b16 %v181
    %v601 = vunpack.c.l.b16 %v182
    %v602 = vunpack.c.h.b16 %v182
    %v603 = vunpack.c.l.b16 %v183
    %v604 = vunpack.c.h.b16 %v183
    %v605 = vunpack.c.l.b16 %v184
    %v606 = vunpack.c.h.b16 %v184
    %v607 = vunpack.c.l.b16 %v185
    %v608 = vunpack.c.h.b16 %v185
    %v609 = vunpack.c.l.b16 %v186
    %v610 = vunpack.c.h.b16 %v186
    %v611 = vunpack.c.l.b16 %v187
    %v612 = vunpack.c.h.b16 %v187
    %v613 = vunpack.c.l.b16 %v188
    %v614 = vunpack.c.h.b16 %v188
    %v615 = vunpack.c.l.b16 %v189
    %v616 = vunpack.c.h.b16 %v189
    %v617 = vunpack.c.l.b16 %v190
    %v618 = vunpack.c.h.b16 %v190
    %v619 = vunpack.c.l.b16 %v191
    %v620 = vunpack.c.h.b16 %v191
    %v621 = vunpack.c.l.b16 %v192
    %v622 = vunpack.c.h.b16 %v192
    %v623 = vunpack.c.l.b16 %v193
    %v624 = vunpack.c.h.b16 %v193
    %v625 = vunpack.c.l.b16 %v194
    %v626 = vunpack.c.h.b16 %v194
    %v627 = vunpack.c.l.b16 %v195
    %v628 = vunpack.c.h.b16 %v195
    %v629 = vunpack.c.l.b16 %v196
    %v630 = vunpack.c.h.b16 %v196
    %v631 = vunpack.c.l.b16 %v197
    %v632 = vunpack.c.h.b16 %v197
    %v633 = vpack.c.b16 %v381, %v377
    %v634 = vpack.c.b16 %v382, %v378
    %v635 = vpack.c.b16 %v383, %v379
    %v636 = vpack.c.b16 %v384, %v380
    %v637 = vpack.c.b16 %v389, %v385
    %v638 = vpack.c.b16 %v390, %v386
    %v639 = vpack.c.b16 %v391, %v387
    %v640 = vpack.c.b16 %v392, %v388
    %v641 = vpack.c.b16 %v397, %v393
    %v642 = vpack.c.b16 %v398, %v394
    %v643 = vpack.c.b16 %v399, %v395
    %v644 = vpack.c.b16 %v400, %v396
    %v645 = vpack.c.b16 %v405, %v401
    %v646 = vpack.c.b16 %v406, %v402
    %v647 = vpack.c.b16 %v407, %v403
    %v648 = vpack.c.b16 %v408, %v404
    %v649 = vpack.c.b16 %v413, %v409
    %v650 = vpack.c.b16 %v414, %v410
    %v651 = vpack.c.b16 %v415, %v411
    %v652 = vpack.c.b16 %v416, %v412
    %v653 = vpack.c.b16 %v421, %v417
    %v654 = vpack.c.b16 %v422, %v418
    %v655 = vpack.c.b16 %v423, %v419
    %v656 = vpack.c.b16 %v424, %v420
    %v657 = vpack.c.b16 %v429, %v425
    %v658 = vpack.c.b16 %v430, %v426
    %v659 = vpack.c.b16 %v431, %v427
    %v660 = vpack.c.b16 %v432, %v428
    %v661 = vpack.c.b16 %v437, %v433
    %v662 = vpack.c.b16 %v438, %v434
    %v663 = vpack.c.b16 %v439, %v435
    %v664 = vpack.c.b16 %v440, %v436
    %v665 = vpack.c.b16 %v445, %v441
    %v666 = vpack.c.b16 %v446, %v442
    %v667 = vpack.c.b16 %v447, %v443
    %v668 = vpack.c.b16 %v448, %v444
    %v669 = vpack.c.b16 %v453, %v449
    %v670 = vpack.c.b16 %v454, %v450
    %v671 = vpack.c.b16 %v455, %v451
    %v672 = vpack.c.b16 %v456, %v452
    %v673 = vpack.c.b16 %v461, %v457
    %v674 = vpack.c.b16 %v462, %v458
    %v675 = vpack.c.b16 %v463, %v459
    %v676 = vpack.c.b16 %v464, %v460
    %v677 = vpack.c.b16 %v469, %v465
    %v678 = vpack.c.b16 %v470, %v466
    %v679 = vpack.c.b16 %v471, %v467
    %v680 = vpack.c.b16 %v472, %v468
    %v681 = vpack.c.b16 %v477, %v473
    %v682 = vpack.c.b16 %v478, %v474
    %v683 = vpack.c.b16 %v479, %v475
    %v684 = vpack.c.b16 %v480, %v476
    %v685 = vpack.c.b16 %v485, %v481
    %v686 = vpack.c.b16 %v486, %v482
    %v687 = vpack.c.b16 %v487, %v483
    %v688 = vpack.c.b16 %v488, %v484
    %v689 = vpack.c.b16 %v493, %v489
    %v690 = vpack.c.b16 %v494, %v490
    %v691 = vpack.c.b16 %v495, %v491
    %v692 = vpack.c.b16 %v496, %v492
    %v693 = vpack.c.b16 %v501, %v497
    %v694 = vpack.c.b16 %v502, %v498
    %v695 = vpack.c.b16 %v503, %v499
    %v696 = vpack.c.b16 %v504, %v500
    %v697 = vpack.c.b16 %v509, %v505
    %v698 = vpack.c.b16 %v510, %v506
    %v699 = vpack.c.b16 %v511, %v507
    %v700 = vpack.c.b16 %v512, %v508
    %v701 = vpack.c.b16 %v517, %v513
    %v702 = vpack.c.b16 %v518, %v514
    %v703 = vpack.c.b16 %v519, %v515
    %v704 = vpack.c.b16 %v520, %v516
    %v705 = vpack.c.b16 %v525, %v521
    %v706 = vpack.c.b16 %v526, %v522
    %v707 = vpack.c.b16 %v527, %v523
    %v708 = vpack.c.b16 %v528, %v524
    %v709 = vpack.c.b16 %v533, %v529
    %v710 = vpack.c.b16 %v534, %v530
    %v711 = vpack.c.b16 %v535, %v531
    %v712 = vpack.c.b16 %v536, %v532
    %v713 = vpack.c.b16 %v541, %v537
    %v714 = vpack.c.b16 %v542, %v538
    %v715 = vpack.c.b16 %v543, %v539
    %v716 = vpack.c.b16 %v544, %v540
    %v717 = vpack.c.b16 %v549, %v545
    %v718 = vpack.c.b16 %v550, %v546
    %v719 = vpack.c.b16 %v551, %v547
    %v720 = vpack.c.b16 %v552, %v548
    %v721 = vpack.c.b16 %v557, %v553
    %v722 = vpack.c.b16 %v558, %v554
    %v723 = vpack.c.b16 %v559, %v555
    %v724 = vpack.c.b16 %v560, %v556
    %v725 = vpack.c.b16 %v565, %v561
    %v726 = vpack.c.b16 %v566, %v562
    %v727 = vpack.c.b16 %v567, %v563
    %v728 = vpack.c.b16 %v568, %v564
    %v729 = vpack.c.b16 %v573, %v569
    %v730 = vpack.c.b16 %v574, %v570
    %v731 = vpack.c.b16 %v575, %v571
    %v732 = vpack.c.b16 %v576, %v572
    %v733 = vpack.c.b16 %v581, %v577
    %v734 = vpack.c.b16 %v582, %v578
    %v735 = vpack.c.b16 %v583, %v579
    %v736 = vpack.c.b16 %v584, %v580
    %v737 = vpack.c.b16 %v589, %v585
    %v738 = vpack.c.b16 %v590, %v586
    %v739 = vpack.c.b16 %v591, %v587
    %v740 = vpack.c.b16 %v592, %v588
    %v741 = vpack.c.b16 %v597, %v593
    %v742 = vpack.c.b16 %v598, %v594
    %v743 = vpack.c.b16 %v599, %v595
    %v744 = vpack.c.b16 %v600, %v596
    %v745 = vpack.c.b16 %v605, %v601
    %v746 = vpack.c.b16 %v606, %v602
    %v747 = vpack.c.b16 %v607, %v603
    %v748 = vpack.c.b16 %v608, %v604
    %v749 = vpack.c.b16 %v613, %v609
    %v750 = vpack.c.b16 %v614, %v610
    %v751 = vpack.c.b16 %v615, %v611
    %v752 = vpack.c.b16 %v616, %v612
    %v753 = vpack.c.b16 %v621, %v617
    %v754 = vpack.c.b16 %v622, %v618
    %v755 = vpack.c.b16 %v623, %v619
    %v756 = vpack.c.b16 %v624, %v620
    %v757 = vpack.c.b16 %v629, %v625
    %v758 = vpack.c.b16 %v630, %v626
    %v759 = vpack.c.b16 %v631, %v627
    %v760 = vpack.c.b16 %v632, %v628
    %889 = vmatprep.subr.bf16.mxu0 %v634
    %890 = vmatpush1.bf16.msra.mxu0 %v633
    %891 = vmatprep.subr.bf16.mxu0 %v638
    %892 = vmatpush1.bf16.msra.mxu0 %v637
    %893 = vmatprep.subr.bf16.mxu0 %v642
    %894 = vmatpush1.bf16.msra.mxu0 %v641
    %895 = vmatprep.subr.bf16.mxu0 %v646
    %896 = vmatpush1.bf16.msra.mxu0 %v645
    %897 = vmatprep.subr.bf16.mxu0 %v650
    %898 = vmatpush1.bf16.msra.mxu0 %v649
    %899 = vmatprep.subr.bf16.mxu0 %v654
    %900 = vmatpush1.bf16.msra.mxu0 %v653
    %901 = vmatprep.subr.bf16.mxu0 %v658
    %902 = vmatpush1.bf16.msra.mxu0 %v657
    %903 = vmatprep.subr.bf16.mxu0 %v662
    %904 = vmatpush1.bf16.msra.mxu0 %v661
    %905 = vmatprep.subr.bf16.mxu0 %v666
    %906 = vmatpush1.bf16.msra.mxu0 %v665
    %907 = vmatprep.subr.bf16.mxu0 %v670
    %908 = vmatpush1.bf16.msra.mxu0 %v669
    %909 = vmatprep.subr.bf16.mxu0 %v674
    %910 = vmatpush1.bf16.msra.mxu0 %v673
    %911 = vmatprep.subr.bf16.mxu0 %v678
    %912 = vmatpush1.bf16.msra.mxu0 %v677
    %913 = vmatprep.subr.bf16.mxu0 %v682
    %914 = vmatpush1.bf16.msra.mxu0 %v681
    %915 = vmatprep.subr.bf16.mxu0 %v686
    %916 = vmatpush1.bf16.msra.mxu0 %v685
    %917 = vmatprep.subr.bf16.mxu0 %v690
    %918 = vmatpush1.bf16.msra.mxu0 %v689
    %919 = vmatprep.subr.bf16.mxu0 %v694
    %920 = vmatpush1.bf16.msra.mxu0 %v693
    %921 = vmatprep.mubr.bf16.mxu0 %v242
    %922 = vmatmul.mubr.bf16.gmra.mrb[0].mxu0 %v235
    %v923 = vpop.f32.mrb[0].mxu0
    %v924 = vadd.f32 %v203, %v923
    %v925 = vpop.f32.mrb[0].mxu0
    %v926 = vadd.f32 %v207, %v925
    %v927 = vpop.f32.mrb[0].mxu0
    %v928 = vpop.f32.mrb[0].mxu0
    %929 = vdwg.mxu0
    %930 = vmatprep.subr.bf16.mxu0 %v698
    %931 = vmatpush1.bf16.msra.mxu0 %v697
    %932 = vmatprep.subr.bf16.mxu0 %v702
    %933 = vmatpush1.bf16.msra.mxu0 %v701
    %934 = vmatprep.subr.bf16.mxu0 %v706
    %935 = vmatpush1.bf16.msra.mxu0 %v705
    %936 = vmatprep.subr.bf16.mxu0 %v710
    %937 = vmatpush1.bf16.msra.mxu0 %v709
    %938 = vmatprep.subr.bf16.mxu0 %v714
    %939 = vmatpush1.bf16.msra.mxu0 %v713
    %940 = vmatprep.subr.bf16.mxu0 %v718
    %941 = vmatpush1.bf16.msra.mxu0 %v717
    %942 = vmatprep.subr.bf16.mxu0 %v722
    %943 = vmatpush1.bf16.msra.mxu0 %v721
    %944 = vmatprep.subr.bf16.mxu0 %v726
    %945 = vmatpush1.bf16.msra.mxu0 %v725
    %946 = vmatprep.subr.bf16.mxu0 %v730
    %947 = vmatpush1.bf16.msra.mxu0 %v729
    %948 = vmatprep.subr.bf16.mxu0 %v734
    %949 = vmatpush1.bf16.msra.mxu0 %v733
    %950 = vmatprep.subr.bf16.mxu0 %v738
    %951 = vmatpush1.bf16.msra.mxu0 %v737
    %952 = vmatprep.subr.bf16.mxu0 %v742
    %953 = vmatpush1.bf16.msra.mxu0 %v741
    %954 = vmatprep.subr.bf16.mxu0 %v746
    %955 = vmatpush1.bf16.msra.mxu0 %v745
    %956 = vmatprep.subr.bf16.mxu0 %v750
    %957 = vmatpush1.bf16.msra.mxu0 %v749
    %958 = vmatprep.subr.bf16.mxu0 %v754
    %959 = vmatpush1.bf16.msra.mxu0 %v753
    %960 = vmatprep.subr.bf16.mxu0 %v758
    %961 = vmatpush1.bf16.msra.mxu0 %v757
    %962 = vmatprep.mubr.bf16.mxu0 %v244
    %963 = vmatmul.mubr.bf16.gmra.mrb[0].mxu0 %v243
    %v964 = vpop.f32.mrb[0].mxu0
    %v965 = vadd.f32 %v924, %v964
    %v966 = vpop.f32.mrb[0].mxu0
    %v967 = vadd.f32 %v926, %v966
    %v968 = vpop.f32.mrb[0].mxu0
    %v969 = vpop.f32.mrb[0].mxu0
    %970 = vdwg.mxu0
    %971 = vmatprep.subr.bf16.mxu0 %v636
    %972 = vmatpush1.bf16.msra.mxu0 %v635
    %973 = vmatprep.subr.bf16.mxu0 %v640
    %974 = vmatpush1.bf16.msra.mxu0 %v639
    %975 = vmatprep.subr.bf16.mxu0 %v644
    %976 = vmatpush1.bf16.msra.mxu0 %v643
    %977 = vmatprep.subr.bf16.mxu0 %v648
    %978 = vmatpush1.bf16.msra.mxu0 %v647
    %979 = vmatprep.subr.bf16.mxu0 %v652
    %980 = vmatpush1.bf16.msra.mxu0 %v651
    %981 = vmatprep.subr.bf16.mxu0 %v656
    %982 = vmatpush1.bf16.msra.mxu0 %v655
    %983 = vmatprep.subr.bf16.mxu0 %v660
    %984 = vmatpush1.bf16.msra.mxu0 %v659
    %985 = vmatprep.subr.bf16.mxu0 %v664
    %986 = vmatpush1.bf16.msra.mxu0 %v663
    %987 = vmatprep.subr.bf16.mxu0 %v668
    %988 = vmatpush1.bf16.msra.mxu0 %v667
    %989 = vmatprep.subr.bf16.mxu0 %v672
    %990 = vmatpush1.bf16.msra.mxu0 %v671
    %991 = vmatprep.subr.bf16.mxu0 %v676
    %992 = vmatpush1.bf16.msra.mxu0 %v675
    %993 = vmatprep.subr.bf16.mxu0 %v680
    %994 = vmatpush1.bf16.msra.mxu0 %v679
    %995 = vmatprep.subr.bf16.mxu0 %v684
    %996 = vmatpush1.bf16.msra.mxu0 %v683
    %997 = vmatprep.subr.bf16.mxu0 %v688
    %998 = vmatpush1.bf16.msra.mxu0 %v687
    %999 = vmatprep.subr.bf16.mxu0 %v692
    %1000 = vmatpush1.bf16.msra.mxu0 %v691
    %1001 = vmatprep.subr.bf16.mxu0 %v696
    %1002 = vmatpush1.bf16.msra.mxu0 %v695
    %1003 = vmatprep.mubr.bf16.mxu0 %v242
    %1004 = vmatmul.mubr.bf16.gmra.mrb[0].mxu0 %v235
    %v1005 = vpop.f32.mrb[0].mxu0
    %v1006 = vadd.f32 %v211, %v1005
    %v1007 = vpop.f32.mrb[0].mxu0
    %v1008 = vadd.f32 %v215, %v1007
    %v1009 = vpop.f32.mrb[0].mxu0
    %v1010 = vpop.f32.mrb[0].mxu0
    %1011 = vdwg.mxu0
    %1012 = vmatprep.subr.bf16.mxu0 %v700
    %1013 = vmatpush1.bf16.msra.mxu0 %v699
    %1014 = vmatprep.subr.bf16.mxu0 %v704
    %1015 = vmatpush1.bf16.msra.mxu0 %v703
    %1016 = vmatprep.subr.bf16.mxu0 %v708
    %1017 = vmatpush1.bf16.msra.mxu0 %v707
    %1018 = vmatprep.subr.bf16.mxu0 %v712
    %1019 = vmatpush1.bf16.msra.mxu0 %v711
    %1020 = vmatprep.subr.bf16.mxu0 %v716
    %1021 = vmatpush1.bf16.msra.mxu0 %v715
    %1022 = vmatprep.subr.bf16.mxu0 %v720
    %1023 = vmatpush1.bf16.msra.mxu0 %v719
    %1024 = vmatprep.subr.bf16.mxu0 %v724
    %1025 = vmatpush1.bf16.msra.mxu0 %v723
    %1026 = vmatprep.subr.bf16.mxu0 %v728
    %1027 = vmatpush1.bf16.msra.mxu0 %v727
    %1028 = vmatprep.subr.bf16.mxu0 %v732
    %1029 = vmatpush1.bf16.msra.mxu0 %v731
    %1030 = vmatprep.subr.bf16.mxu0 %v736
    %1031 = vmatpush1.bf16.msra.mxu0 %v735
    %1032 = vmatprep.subr.bf16.mxu0 %v740
    %1033 = vmatpush1.bf16.msra.mxu0 %v739
    %1034 = vmatprep.subr.bf16.mxu0 %v744
    %1035 = vmatpush1.bf16.msra.mxu0 %v743
    %1036 = vmatprep.subr.bf16.mxu0 %v748
    %1037 = vmatpush1.bf16.msra.mxu0 %v747
    %1038 = vmatprep.subr.bf16.mxu0 %v752
    %1039 = vmatpush1.bf16.msra.mxu0 %v751
    %1040 = vmatprep.subr.bf16.mxu0 %v756
    %1041 = vmatpush1.bf16.msra.mxu0 %v755
    %1042 = vmatprep.subr.bf16.mxu0 %v760
    %1043 = vmatpush1.bf16.msra.mxu0 %v759
    %1044 = vmatprep.mubr.bf16.mxu0 %v244
    %1045 = vmatmul.mubr.bf16.gmra.mrb[0].mxu0 %v243
    %v1046 = vpop.f32.mrb[0].mxu0
    %v1047 = vadd.f32 %v1006, %v1046
    %v1048 = vpop.f32.mrb[0].mxu0
    %v1049 = vadd.f32 %v1008, %v1048
    %v1050 = vpop.f32.mrb[0].mxu0
    %v1051 = vpop.f32.mrb[0].mxu0
    %1052 = vdwg.mxu0
    %v1053 = vmul.f32 %v965, 0.2
    %v1054 = vmul.f32 %v967, 0.2
    %v1055 = vmul.f32 %v1047, 0.2
    %v1056 = vmul.f32 %v1049, 0.2
    %v1057 = vmax.f32 %v965, %v1053
    %v1058 = vmax.f32 %v967, %v1054
    %v1059 = vmax.f32 %v1047, %v1055
    %v1060 = vmax.f32 %v1049, %v1056
    %v1061 = vpack.c.bf16 %v1057, %v1057
    %v1062 = vpack.c.bf16 %v1058, %v1058
    %v1063 = vpack.c.bf16 %v1059, %v1059
    %v1064 = vpack.c.bf16 %v1060, %v1060
    %v1065 = vld [vmem:[#allocation8] sm:$0xff]
    %v1066 = vld [vmem:[#allocation8 + $0x8] sm:$0xff]
    %v1067 = vld [vmem:[#allocation8 + $0x10] sm:$0xff]
    %v1068 = vld [vmem:[#allocation8 + $0x18] sm:$0xff]
    %v1069 = vld [vmem:[#allocation8 + $0x20] sm:$0xff]
    %v1070 = vld [vmem:[#allocation8 + $0x28] sm:$0xff]
    %v1071 = vld [vmem:[#allocation8 + $0x30] sm:$0xff]
    %v1072 = vld [vmem:[#allocation8 + $0x38] sm:$0xff]
    %v1073 = vld [vmem:[#allocation8 + $0x40] sm:$0xff]
    %v1074 = vld [vmem:[#allocation8 + $0x48] sm:$0xff]
    %v1075 = vld [vmem:[#allocation8 + $0x50] sm:$0xff]
    %v1076 = vld [vmem:[#allocation8 + $0x58] sm:$0xff]
    %v1077 = vld [vmem:[#allocation8 + $0x60] sm:$0xff]
    %v1078 = vld [vmem:[#allocation8 + $0x68] sm:$0xff]
    %v1079 = vld [vmem:[#allocation8 + $0x70] sm:$0xff]
    %v1080 = vld [vmem:[#allocation8 + $0x78] sm:$0xff]
    %v1081 = vld [vmem:[#allocation8 + $0x80] sm:$0xff]
    %v1082 = vld [vmem:[#allocation8 + $0x88] sm:$0xff]
    %v1083 = vld [vmem:[#allocation8 + $0x90] sm:$0xff]
    %v1084 = vld [vmem:[#allocation8 + $0x98] sm:$0xff]
    %v1085 = vld [vmem:[#allocation8 + $0xa0] sm:$0xff]
    %v1086 = vld [vmem:[#allocation8 + $0xa8] sm:$0xff]
    %v1087 = vld [vmem:[#allocation8 + $0xb0] sm:$0xff]
    %v1088 = vld [vmem:[#allocation8 + $0xb8] sm:$0xff]
    %v1089 = vld [vmem:[#allocation8 + $0xc0] sm:$0xff]
    %v1090 = vld [vmem:[#allocation8 + $0xc8] sm:$0xff]
    %v1091 = vld [vmem:[#allocation8 + $0xd0] sm:$0xff]
    %v1092 = vld [vmem:[#allocation8 + $0xd8] sm:$0xff]
    %v1093 = vld [vmem:[#allocation8 + $0xe0] sm:$0xff]
    %v1094 = vld [vmem:[#allocation8 + $0xe8] sm:$0xff]
    %v1095 = vld [vmem:[#allocation8 + $0xf0] sm:$0xff]
    %v1096 = vld [vmem:[#allocation8 + $0xf8] sm:$0xff]
    %v1097 = vld [vmem:[#allocation8 + $0x100] sm:$0xff]
    %v1098 = vld [vmem:[#allocation8 + $0x108] sm:$0xff]
    %v1099 = vld [vmem:[#allocation8 + $0x110] sm:$0xff]
    %v1100 = vld [vmem:[#allocation8 + $0x118] sm:$0xff]
    %v1101 = vld [vmem:[#allocation8 + $0x120] sm:$0xff]
    %v1102 = vld [vmem:[#allocation8 + $0x128] sm:$0xff]
    %v1103 = vld [vmem:[#allocation8 + $0x130] sm:$0xff]
    %v1104 = vld [vmem:[#allocation8 + $0x138] sm:$0xff]
    %v1105 = vld [vmem:[#allocation8 + $0x140] sm:$0xff]
    %v1106 = vld [vmem:[#allocation8 + $0x148] sm:$0xff]
    %v1107 = vld [vmem:[#allocation8 + $0x150] sm:$0xff]
    %v1108 = vld [vmem:[#allocation8 + $0x158] sm:$0xff]
    %v1109 = vld [vmem:[#allocation8 + $0x160] sm:$0xff]
    %v1110 = vld [vmem:[#allocation8 + $0x168] sm:$0xff]
    %v1111 = vld [vmem:[#allocation8 + $0x170] sm:$0xff]
    %v1112 = vld [vmem:[#allocation8 + $0x178] sm:$0xff]
    %v1113 = vld [vmem:[#allocation8 + $0x180] sm:$0xff]
    %v1114 = vld [vmem:[#allocation8 + $0x188] sm:$0xff]
    %v1115 = vld [vmem:[#allocation8 + $0x190] sm:$0xff]
    %v1116 = vld [vmem:[#allocation8 + $0x198] sm:$0xff]
    %v1117 = vld [vmem:[#allocation8 + $0x1a0] sm:$0xff]
    %v1118 = vld [vmem:[#allocation8 + $0x1a8] sm:$0xff]
    %v1119 = vld [vmem:[#allocation8 + $0x1b0] sm:$0xff]
    %v1120 = vld [vmem:[#allocation8 + $0x1b8] sm:$0xff]
    %v1121 = vld [vmem:[#allocation8 + $0x1c0] sm:$0xff]
    %v1122 = vld [vmem:[#allocation8 + $0x1c8] sm:$0xff]
    %v1123 = vld [vmem:[#allocation8 + $0x1d0] sm:$0xff]
    %v1124 = vld [vmem:[#allocation8 + $0x1d8] sm:$0xff]
    %v1125 = vld [vmem:[#allocation8 + $0x1e0] sm:$0xff]
    %v1126 = vld [vmem:[#allocation8 + $0x1e8] sm:$0xff]
    %v1127 = vld [vmem:[#allocation8 + $0x1f0] sm:$0xff]
    %v1128 = vld [vmem:[#allocation8 + $0x1f8] sm:$0xff]
    %v1129 = vld [vmem:[%s4] sm:$0x3]
    %v1131 = vlaneseq
    %v1132 = vshrl.u32 %v1131, 7
    %v1133 = vsub.s32 0, %v1132
    %v1134 = vrot.slane %v1129, %v1133
    %v1135 = vlaneseq
    %v1136 = vshrl.u32 %v1135, 7
    %v1137 = vsub.s32 1, %v1136
    %v1138 = vrot.slane %v1129, %v1137
    %v1205 = vunpack.c.l.b16 %v1065
    %v1206 = vunpack.c.h.b16 %v1065
    %v1207 = vunpack.c.l.b16 %v1066
    %v1208 = vunpack.c.h.b16 %v1066
    %v1209 = vunpack.c.l.b16 %v1067
    %v1210 = vunpack.c.h.b16 %v1067
    %v1211 = vunpack.c.l.b16 %v1068
    %v1212 = vunpack.c.h.b16 %v1068
    %v1213 = vunpack.c.l.b16 %v1069
    %v1214 = vunpack.c.h.b16 %v1069
    %v1215 = vunpack.c.l.b16 %v1070
    %v1216 = vunpack.c.h.b16 %v1070
    %v1217 = vunpack.c.l.b16 %v1071
    %v1218 = vunpack.c.h.b16 %v1071
    %v1219 = vunpack.c.l.b16 %v1072
    %v1220 = vunpack.c.h.b16 %v1072
    %v1221 = vunpack.c.l.b16 %v1073
    %v1222 = vunpack.c.h.b16 %v1073
    %v1223 = vunpack.c.l.b16 %v1074
    %v1224 = vunpack.c.h.b16 %v1074
    %v1225 = vunpack.c.l.b16 %v1075
    %v1226 = vunpack.c.h.b16 %v1075
    %v1227 = vunpack.c.l.b16 %v1076
    %v1228 = vunpack.c.h.b16 %v1076
    %v1229 = vunpack.c.l.b16 %v1077
    %v1230 = vunpack.c.h.b16 %v1077
    %v1231 = vunpack.c.l.b16 %v1078
    %v1232 = vunpack.c.h.b16 %v1078
    %v1233 = vunpack.c.l.b16 %v1079
    %v1234 = vunpack.c.h.b16 %v1079
    %v1235 = vunpack.c.l.b16 %v1080
    %v1236 = vunpack.c.h.b16 %v1080
    %v1237 = vunpack.c.l.b16 %v1081
    %v1238 = vunpack.c.h.b16 %v1081
    %v1239 = vunpack.c.l.b16 %v1082
    %v1240 = vunpack.c.h.b16 %v1082
    %v1241 = vunpack.c.l.b16 %v1083
    %v1242 = vunpack.c.h.b16 %v1083
    %v1243 = vunpack.c.l.b16 %v1084
    %v1244 = vunpack.c.h.b16 %v1084
    %v1245 = vunpack.c.l.b16 %v1085
    %v1246 = vunpack.c.h.b16 %v1085
    %v1247 = vunpack.c.l.b16 %v1086
    %v1248 = vunpack.c.h.b16 %v1086
    %v1249 = vunpack.c.l.b16 %v1087
    %v1250 = vunpack.c.h.b16 %v1087
    %v1251 = vunpack.c.l.b16 %v1088
    %v1252 = vunpack.c.h.b16 %v1088
    %v1253 = vunpack.c.l.b16 %v1089
    %v1254 = vunpack.c.h.b16 %v1089
    %v1255 = vunpack.c.l.b16 %v1090
    %v1256 = vunpack.c.h.b16 %v1090
    %v1257 = vunpack.c.l.b16 %v1091
    %v1258 = vunpack.c.h.b16 %v1091
    %v1259 = vunpack.c.l.b16 %v1092
    %v1260 = vunpack.c.h.b16 %v1092
    %v1261 = vunpack.c.l.b16 %v1093
    %v1262 = vunpack.c.h.b16 %v1093
    %v1263 = vunpack.c.l.b16 %v1094
    %v1264 = vunpack.c.h.b16 %v1094
    %v1265 = vunpack.c.l.b16 %v1095
    %v1266 = vunpack.c.h.b16 %v1095
    %v1267 = vunpack.c.l.b16 %v1096
    %v1268 = vunpack.c.h.b16 %v1096
    %v1269 = vunpack.c.l.b16 %v1097
    %v1270 = vunpack.c.h.b16 %v1097
    %v1271 = vunpack.c.l.b16 %v1098
    %v1272 = vunpack.c.h.b16 %v1098
    %v1273 = vunpack.c.l.b16 %v1099
    %v1274 = vunpack.c.h.b16 %v1099
    %v1275 = vunpack.c.l.b16 %v1100
    %v1276 = vunpack.c.h.b16 %v1100
    %v1277 = vunpack.c.l.b16 %v1101
    %v1278 = vunpack.c.h.b16 %v1101
    %v1279 = vunpack.c.l.b16 %v1102
    %v1280 = vunpack.c.h.b16 %v1102
    %v1281 = vunpack.c.l.b16 %v1103
    %v1282 = vunpack.c.h.b16 %v1103
    %v1283 = vunpack.c.l.b16 %v1104
    %v1284 = vunpack.c.h.b16 %v1104
    %v1285 = vunpack.c.l.b16 %v1105
    %v1286 = vunpack.c.h.b16 %v1105
    %v1287 = vunpack.c.l.b16 %v1106
    %v1288 = vunpack.c.h.b16 %v1106
    %v1289 = vunpack.c.l.b16 %v1107
    %v1290 = vunpack.c.h.b16 %v1107
    %v1291 = vunpack.c.l.b16 %v1108
    %v1292 = vunpack.c.h.b16 %v1108
    %v1293 = vunpack.c.l.b16 %v1109
    %v1294 = vunpack.c.h.b16 %v1109
    %v1295 = vunpack.c.l.b16 %v1110
    %v1296 = vunpack.c.h.b16 %v1110
    %v1297 = vunpack.c.l.b16 %v1111
    %v1298 = vunpack.c.h.b16 %v1111
    %v1299 = vunpack.c.l.b16 %v1112
    %v1300 = vunpack.c.h.b16 %v1112
    %v1301 = vunpack.c.l.b16 %v1113
    %v1302 = vunpack.c.h.b16 %v1113
    %v1303 = vunpack.c.l.b16 %v1114
    %v1304 = vunpack.c.h.b16 %v1114
    %v1305 = vunpack.c.l.b16 %v1115
    %v1306 = vunpack.c.h.b16 %v1115
    %v1307 = vunpack.c.l.b16 %v1116
    %v1308 = vunpack.c.h.b16 %v1116
    %v1309 = vunpack.c.l.b16 %v1117
    %v1310 = vunpack.c.h.b16 %v1117
    %v1311 = vunpack.c.l.b16 %v1118
    %v1312 = vunpack.c.h.b16 %v1118
    %v1313 = vunpack.c.l.b16 %v1119
    %v1314 = vunpack.c.h.b16 %v1119
    %v1315 = vunpack.c.l.b16 %v1120
    %v1316 = vunpack.c.h.b16 %v1120
    %v1317 = vunpack.c.l.b16 %v1121
    %v1318 = vunpack.c.h.b16 %v1121
    %v1319 = vunpack.c.l.b16 %v1122
    %v1320 = vunpack.c.h.b16 %v1122
    %v1321 = vunpack.c.l.b16 %v1123
    %v1322 = vunpack.c.h.b16 %v1123
    %v1323 = vunpack.c.l.b16 %v1124
    %v1324 = vunpack.c.h.b16 %v1124
    %v1325 = vunpack.c.l.b16 %v1125
    %v1326 = vunpack.c.h.b16 %v1125
    %v1327 = vunpack.c.l.b16 %v1126
    %v1328 = vunpack.c.h.b16 %v1126
    %v1329 = vunpack.c.l.b16 %v1127
    %v1330 = vunpack.c.h.b16 %v1127
    %v1331 = vunpack.c.l.b16 %v1128
    %v1332 = vunpack.c.h.b16 %v1128
    %v1333 = vpack.c.b16 %v1207, %v1205
    %v1334 = vpack.c.b16 %v1208, %v1206
    %v1335 = vpack.c.b16 %v1211, %v1209
    %v1336 = vpack.c.b16 %v1212, %v1210
    %v1337 = vpack.c.b16 %v1215, %v1213
    %v1338 = vpack.c.b16 %v1216, %v1214
    %v1339 = vpack.c.b16 %v1219, %v1217
    %v1340 = vpack.c.b16 %v1220, %v1218
    %v1341 = vpack.c.b16 %v1223, %v1221
    %v1342 = vpack.c.b16 %v1224, %v1222
    %v1343 = vpack.c.b16 %v1227, %v1225
    %v1344 = vpack.c.b16 %v1228, %v1226
    %v1345 = vpack.c.b16 %v1231, %v1229
    %v1346 = vpack.c.b16 %v1232, %v1230
    %v1347 = vpack.c.b16 %v1235, %v1233
    %v1348 = vpack.c.b16 %v1236, %v1234
    %v1349 = vpack.c.b16 %v1239, %v1237
    %v1350 = vpack.c.b16 %v1240, %v1238
    %v1351 = vpack.c.b16 %v1243, %v1241
    %v1352 = vpack.c.b16 %v1244, %v1242
    %v1353 = vpack.c.b16 %v1247, %v1245
    %v1354 = vpack.c.b16 %v1248, %v1246
    %v1355 = vpack.c.b16 %v1251, %v1249
    %v1356 = vpack.c.b16 %v1252, %v1250
    %v1357 = vpack.c.b16 %v1255, %v1253
    %v1358 = vpack.c.b16 %v1256, %v1254
    %v1359 = vpack.c.b16 %v1259, %v1257
    %v1360 = vpack.c.b16 %v1260, %v1258
    %v1361 = vpack.c.b16 %v1263, %v1261
    %v1362 = vpack.c.b16 %v1264, %v1262
    %v1363 = vpack.c.b16 %v1267, %v1265
    %v1364 = vpack.c.b16 %v1268, %v1266
    %v1365 = vpack.c.b16 %v1271, %v1269
    %v1366 = vpack.c.b16 %v1272, %v1270
    %v1367 = vpack.c.b16 %v1275, %v1273
    %v1368 = vpack.c.b16 %v1276, %v1274
    %v1369 = vpack.c.b16 %v1279, %v1277
    %v1370 = vpack.c.b16 %v1280, %v1278
    %v1371 = vpack.c.b16 %v1283, %v1281
    %v1372 = vpack.c.b16 %v1284, %v1282
    %v1373 = vpack.c.b16 %v1287, %v1285
    %v1374 = vpack.c.b16 %v1288, %v1286
    %v1375 = vpack.c.b16 %v1291, %v1289
    %v1376 = vpack.c.b16 %v1292, %v1290
    %v1377 = vpack.c.b16 %v1295, %v1293
    %v1378 = vpack.c.b16 %v1296, %v1294
    %v1379 = vpack.c.b16 %v1299, %v1297
    %v1380 = vpack.c.b16 %v1300, %v1298
    %v1381 = vpack.c.b16 %v1303, %v1301
    %v1382 = vpack.c.b16 %v1304, %v1302
    %v1383 = vpack.c.b16 %v1307, %v1305
    %v1384 = vpack.c.b16 %v1308, %v1306
    %v1385 = vpack.c.b16 %v1311, %v1309
    %v1386 = vpack.c.b16 %v1312, %v1310
    %v1387 = vpack.c.b16 %v1315, %v1313
    %v1388 = vpack.c.b16 %v1316, %v1314
    %v1389 = vpack.c.b16 %v1319, %v1317
    %v1390 = vpack.c.b16 %v1320, %v1318
    %v1391 = vpack.c.b16 %v1323, %v1321
    %v1392 = vpack.c.b16 %v1324, %v1322
    %v1393 = vpack.c.b16 %v1327, %v1325
    %v1394 = vpack.c.b16 %v1328, %v1326
    %v1395 = vpack.c.b16 %v1331, %v1329
    %v1396 = vpack.c.b16 %v1332, %v1330
    %1461 = vmatprep.subr.bf16.mxu0 %v1334
    %1462 = vmatpush1.bf16.msra.mxu0 %v1333
    %1463 = vmatprep.subr.bf16.mxu0 %v1336
    %1464 = vmatpush1.bf16.msra.mxu0 %v1335
    %1465 = vmatprep.subr.bf16.mxu0 %v1338
    %1466 = vmatpush1.bf16.msra.mxu0 %v1337
    %1467 = vmatprep.subr.bf16.mxu0 %v1340
    %1468 = vmatpush1.bf16.msra.mxu0 %v1339
    %1469 = vmatprep.subr.bf16.mxu0 %v1342
    %1470 = vmatpush1.bf16.msra.mxu0 %v1341
    %1471 = vmatprep.subr.bf16.mxu0 %v1344
    %1472 = vmatpush1.bf16.msra.mxu0 %v1343
    %1473 = vmatprep.subr.bf16.mxu0 %v1346
    %1474 = vmatpush1.bf16.msra.mxu0 %v1345
    %1475 = vmatprep.subr.bf16.mxu0 %v1348
    %1476 = vmatpush1.bf16.msra.mxu0 %v1347
    %1477 = vmatprep.subr.bf16.mxu0 %v1350
    %1478 = vmatpush1.bf16.msra.mxu0 %v1349
    %1479 = vmatprep.subr.bf16.mxu0 %v1352
    %1480 = vmatpush1.bf16.msra.mxu0 %v1351
    %1481 = vmatprep.subr.bf16.mxu0 %v1354
    %1482 = vmatpush1.bf16.msra.mxu0 %v1353
    %1483 = vmatprep.subr.bf16.mxu0 %v1356
    %1484 = vmatpush1.bf16.msra.mxu0 %v1355
    %1485 = vmatprep.subr.bf16.mxu0 %v1358
    %1486 = vmatpush1.bf16.msra.mxu0 %v1357
    %1487 = vmatprep.subr.bf16.mxu0 %v1360
    %1488 = vmatpush1.bf16.msra.mxu0 %v1359
    %1489 = vmatprep.subr.bf16.mxu0 %v1362
    %1490 = vmatpush1.bf16.msra.mxu0 %v1361
    %1491 = vmatprep.subr.bf16.mxu0 %v1364
    %1492 = vmatpush1.bf16.msra.mxu0 %v1363
    %1493 = vmatprep.mubr.bf16.mxu0 %v1062
    %1494 = vmatmul.mubr.bf16.gmra.mrb[0].mxu0 %v1061
    %v1495 = vpop.f32.mrb[0].mxu0
    %v1496 = vadd.f32 %v1134, %v1495
    %v1497 = vpop.f32.mrb[0].mxu0
    %v1498 = vadd.f32 %v1138, %v1497
    %v1499 = vpop.f32.mrb[0].mxu0
    %v1500 = vpop.f32.mrb[0].mxu0
    %1501 = vdwg.mxu0
    %1502 = vmatprep.subr.bf16.mxu0 %v1366
    %1503 = vmatpush1.bf16.msra.mxu0 %v1365
    %1504 = vmatprep.subr.bf16.mxu0 %v1368
    %1505 = vmatpush1.bf16.msra.mxu0 %v1367
    %1506 = vmatprep.subr.bf16.mxu0 %v1370
    %1507 = vmatpush1.bf16.msra.mxu0 %v1369
    %1508 = vmatprep.subr.bf16.mxu0 %v1372
    %1509 = vmatpush1.bf16.msra.mxu0 %v1371
    %1510 = vmatprep.subr.bf16.mxu0 %v1374
    %1511 = vmatpush1.bf16.msra.mxu0 %v1373
    %1512 = vmatprep.subr.bf16.mxu0 %v1376
    %1513 = vmatpush1.bf16.msra.mxu0 %v1375
    %1514 = vmatprep.subr.bf16.mxu0 %v1378
    %1515 = vmatpush1.bf16.msra.mxu0 %v1377
    %1516 = vmatprep.subr.bf16.mxu0 %v1380
    %1517 = vmatpush1.bf16.msra.mxu0 %v1379
    %1518 = vmatprep.subr.bf16.mxu0 %v1382
    %1519 = vmatpush1.bf16.msra.mxu0 %v1381
    %1520 = vmatprep.subr.bf16.mxu0 %v1384
    %1521 = vmatpush1.bf16.msra.mxu0 %v1383
    %1522 = vmatprep.subr.bf16.mxu0 %v1386
    %1523 = vmatpush1.bf16.msra.mxu0 %v1385
    %1524 = vmatprep.subr.bf16.mxu0 %v1388
    %1525 = vmatpush1.bf16.msra.mxu0 %v1387
    %1526 = vmatprep.subr.bf16.mxu0 %v1390
    %1527 = vmatpush1.bf16.msra.mxu0 %v1389
    %1528 = vmatprep.subr.bf16.mxu0 %v1392
    %1529 = vmatpush1.bf16.msra.mxu0 %v1391
    %1530 = vmatprep.subr.bf16.mxu0 %v1394
    %1531 = vmatpush1.bf16.msra.mxu0 %v1393
    %1532 = vmatprep.subr.bf16.mxu0 %v1396
    %1533 = vmatpush1.bf16.msra.mxu0 %v1395
    %1534 = vmatprep.mubr.bf16.mxu0 %v1064
    %1535 = vmatmul.mubr.bf16.gmra.mrb[0].mxu0 %v1063
    %v1536 = vpop.f32.mrb[0].mxu0
    %v1537 = vadd.f32 %v1496, %v1536
    %v1538 = vpop.f32.mrb[0].mxu0
    %v1539 = vadd.f32 %v1498, %v1538
    %v1540 = vpop.f32.mrb[0].mxu0
    %v1541 = vpop.f32.mrb[0].mxu0
    %1542 = vdwg.mxu0
    %v1543 = vmul.f32 %v1537, 0.2
    %v1544 = vmul.f32 %v1539, 0.2
    %v1545 = vmax.f32 %v1537, %v1543
    %v1546 = vmax.f32 %v1539, %v1544
    %v1547 = vld [vmem:[%s5] sm:$0x3]
    %v1548 = vpack.c.bf16 %v1545, %v1545
    %v1549 = vpack.c.bf16 %v1546, %v1546
    %v1550 = vld [vmem:[#allocation2] sm:$0x1]
    %1552 = vset.pattern.permute.xlu0 0
    %1553 = vperm.xlu0 %1552, %v1550
    %v1554 = vpop.permute.xlu0 %1553
    %v1556 = vlaneseq
    %v1557 = vshrl.u32 %v1556, 7
    %v1558 = vsub.s32 0, %v1557
    %v1559 = vrot.slane %v1554, %v1558
    %v1562 = vunpack.c.l.s4 1966171168
    %v1563 = vunpack.c.0.s8 %v1562
    %v1564 = vlaneseq
    %v1565 = vshrl.u32 %v1564, 7
    %v1566 = vsub.s32 %v1563, %v1565
    %v1567 = vrot.slane %v1547, %v1566
    %v1568 = vcombine.high %v1567, %v1567
    %v1570 = vunpack.c.l.s4 1966171168
    %v1571 = vunpack.c.0.s8 %v1570
    %v1572 = vlaneseq
    %v1573 = vshrl.u32 %v1572, 7
    %v1574 = vsub.s32 %v1571, %v1573
    %v1575 = vrot.slane %v1567, %v1574
    %v1577 = vunpack.c.l.s4 1966171168
    %v1578 = vunpack.c.0.s8 %v1577
    %v1579 = vlaneseq
    %v1580 = vshrl.u32 %v1579, 7
    %v1581 = vsub.s32 %v1578, %v1580
    %v1582 = vrot.slane %v1568, %v1581
    %1585 = vmatprep.subr.bf16.mxu0 %v1549
    %1586 = vmatpush1.bf16.xpose.msra.mxu0 %v1548
    %1587 = vmatprep.subr.bf16.mxu0 0
    %1588 = vmatpush1.bf16.xpose.msra.mxu0 0
    %1589 = vmatprep.subr.bf16.mxu0 0
    %1590 = vmatpush1.bf16.xpose.msra.mxu0 0
    %1591 = vmatprep.subr.bf16.mxu0 0
    %1592 = vmatpush1.bf16.xpose.msra.mxu0 0
    %1593 = vmatprep.subr.bf16.mxu0 0
    %1594 = vmatpush1.bf16.xpose.msra.mxu0 0
    %1595 = vmatprep.subr.bf16.mxu0 0
    %1596 = vmatpush1.bf16.xpose.msra.mxu0 0
    %1597 = vmatprep.subr.bf16.mxu0 0
    %1598 = vmatpush1.bf16.xpose.msra.mxu0 0
    %1599 = vmatprep.subr.bf16.mxu0 0
    %1600 = vmatpush1.bf16.xpose.msra.mxu0 0
    %1601 = vmatprep.subr.bf16.mxu0 0
    %1602 = vmatpush1.bf16.xpose.msra.mxu0 0
    %1603 = vmatprep.subr.bf16.mxu0 0
    %1604 = vmatpush1.bf16.xpose.msra.mxu0 0
    %1605 = vmatprep.subr.bf16.mxu0 0
    %1606 = vmatpush1.bf16.xpose.msra.mxu0 0
    %1607 = vmatprep.subr.bf16.mxu0 0
    %1608 = vmatpush1.bf16.xpose.msra.mxu0 0
    %1609 = vmatprep.subr.bf16.mxu0 0
    %1610 = vmatpush1.bf16.xpose.msra.mxu0 0
    %1611 = vmatprep.subr.bf16.mxu0 0
    %1612 = vmatpush1.bf16.xpose.msra.mxu0 0
    %1613 = vmatprep.subr.bf16.mxu0 0
    %1614 = vmatpush1.bf16.xpose.msra.mxu0 0
    %1615 = vmatprep.subr.bf16.mxu0 0
    %1616 = vmatpush1.bf16.xpose.msra.mxu0 0
    %1617 = vmatprep.mubr.bf16.mxu0 %v1582
    %1618 = vmatmul.mubr.bf16.gmra.mrb[0].mxu0 %v1575
    %v1619 = vpop.f32.mrb[0].mxu0
    %v1620 = vadd.f32 %v1559, %v1619
    %v1621 = vpop.f32.mrb[0].mxu0
    %v1622 = vpop.f32.mrb[0].mxu0
    %v1623 = vpop.f32.mrb[0].mxu0
    %1624 = vdwg.mxu0
    %vm1625 = vcmask 8192
    %1626 = vst.msk [vmem:[#allocation9] sm:$0x1] %vm1625, %v1620
    // Predicated region
    $region42: #{tpu_custom_call.1} parent=1 // pred_check
      _
    $region43: #{tpu_custom_call.1} parent=1 // pred_check_branch
      %1628 = sbr.rel (0) target = $region45
    $region44: #{tpu_custom_call.1} parent=1 // pred_region
      %s1630 = ssub.s32 16, 16
      %1631 = vsyncadd [#allocation5], %s1630
      %s1633 = sshll.u32 [#allocation9], 4
      %s1634 = int_to_ptr.vmem [resolvable:$true] %s1633
      %1636 = dma.vmem_to_hbm [thread:$0]  %s1634, 16, %s7, [#allocation5]
    $region45: #{tpu_custom_call.1} parent=1 // pred_fallthru
      _
    // Predicated region
    $region46: #{tpu_custom_call.1} parent=1 // pred_check
      _
    $region47: #{tpu_custom_call.1} parent=1 // pred_check_branch
      %1638 = sbr.rel (0) target = $region49
    $region48: #{tpu_custom_call.1} parent=1 // pred_region
      %1639 = dma.done [#allocation5], 16
    $region49: #{tpu_custom_call.1} parent=1 // pred_fallthru
      _
    %1640 = vsyncpa [#allocation4], 1
    %1641 = vsyncpa [#allocation7], 1
    %1642 = vsyncpa [#allocation5], 1

</llo_original>
